<compile_context>
chip_gen: v7x
topology: tpu7x:2x2x1
jax: 0.10.0
libtpu: 0.0.40
codegen_flags: <defaults>
</compile_context>

<pallas_src>
import functools

import jax
import jax.numpy as jnp
import numpy as np
from jax.experimental import pallas as pl
from jax.experimental.pallas import tpu as pltpu

SR = 8  # row-strip height (one sublane tile)


# ---------------------------------------------------------------------------
# median selection helpers (min/max compare-exchanges only -> pure VPU work)
# ---------------------------------------------------------------------------

def _cmpswap(a, b):
    return jnp.minimum(a, b), jnp.maximum(a, b)


def _med3(a, b, c):
    lo = jnp.minimum(a, b)
    hi = jnp.maximum(a, b)
    return jnp.maximum(lo, jnp.minimum(hi, c))


def _drop_min_max(work):
    """Return the multiset minus one global min and one global max (CE passes)."""
    w = list(work)
    s = len(w)
    for i in range(s - 1):                 # push max to the back
        w[i], w[i + 1] = _cmpswap(w[i], w[i + 1])
    for i in range(s - 2, 0, -1):          # push min to the front
        w[i - 1], w[i] = _cmpswap(w[i - 1], w[i])
    return w[1:-1]


def _select_lower_median(loaders):
    """Median of n = len(loaders) values (n odd) via forgetful selection.
    `loaders` are thunks so taps are consumed lazily (bounds the live set)."""
    n = len(loaders)
    if n == 1:
        return loaders[0]()
    m = n // 2
    work = [loaders[i]() for i in range(m + 2)]
    for t in range(m + 2, n):
        work = _drop_min_max(work)
        work.append(loaders[t]())
    a, b, c = work
    return _med3(a, b, c)


# ---------------------------------------------------------------------------
# Pallas kernels
# ---------------------------------------------------------------------------

def _median3_kernel(x_ref, o_ref):
    # x_ref: (1, Hout + 2, L) zero-padded packed block; o_ref: (1, Hout, L).
    _, Hout, L = o_ref.shape

    @pl.loop(0, Hout // SR)
    def _(si):
        r0 = pl.multiple_of(si * SR, SR)
        a = x_ref[0, pl.ds(r0, SR), :]
        b = x_ref[0, pl.ds(r0 + 1, SR), :]
        c = x_ref[0, pl.ds(r0 + 2, SR), :]
        # sort each vertical triple (shared by the 3 horizontally-adjacent outputs)
        lo, t = _cmpswap(a, b)
        mid, hi = _cmpswap(t, c)
        lo, mid = _cmpswap(lo, mid)

        # horizontal step on lane-rolled copies (XLU); the result is invariant
        # to the roll direction since the +-1 shifted sets are symmetric, and
        # the wrapped lanes only land in per-channel padding lanes (cropped).
        def nbrs(v):
            return pltpu.roll(v, 1, axis=1), v, pltpu.roll(v, L - 1, axis=1)

        l0, l1, l2 = nbrs(lo)
        lo_h = jnp.maximum(jnp.maximum(l0, l1), l2)
        m0, m1, m2 = nbrs(mid)
        mid_h = _med3(m0, m1, m2)
        h0, h1, h2 = nbrs(hi)
        hi_h = jnp.minimum(jnp.minimum(h0, h1), h2)

        o_ref[0, pl.ds(r0, SR), :] = _med3(lo_h, mid_h, hi_h)


def _median_generic_kernel(x_ref, o_ref, taps_ref, *, k, ch):
    # x_ref: (1, Hout + 2p, L); o_ref: (1, Hout, L)
    # taps_ref: (k*k, SR, L) staging scratch for the lane-shifted tap slabs.
    _, Hout, L = o_ref.shape
    p = (k - 1) // 2
    nt = k * k

    @pl.loop(0, Hout // SR)
    def _(si):
        r0 = pl.multiple_of(si * SR, SR)

        # stage all k*k lane-shifted tap slabs for this strip (rolls on the XLU;
        # wrapped lanes |shift| <= p only contaminate padding lanes).
        for dy in range(k):
            row = x_ref[0, pl.ds(r0 + dy, SR), :]
            for dx in range(k):
                s = (p - dx) % L
                tap = row if s == 0 else pltpu.roll(row, s, axis=1)
                taps_ref[dy * k + dx, :, :] = tap

        # lane-chunk loop bounds the selection network's live vreg set.
        @pl.loop(0, L // ch)
        def _(ci):
            c0 = pl.multiple_of(ci * ch, 128)
            loaders = [(lambda t=t: taps_ref[t, :, pl.ds(c0, ch)])
                       for t in range(nt)]
            o_ref[0, pl.ds(r0, SR), pl.ds(c0, ch)] = _select_lower_median(loaders)


# ---------------------------------------------------------------------------
# wrapper
# ---------------------------------------------------------------------------

def _round_up(x, m):
    return ((x + m - 1) // m) * m


def _choose_groups(nc, wp, hin, hout, k):
    """Pick G (grid steps) dividing N*C; each step packs (N*C)/G channel
    planes along lanes. Scores the real per-step VMEM footprint."""
    target = 4 * 2**20
    best_key, best = None, (1, nc)
    for g in range(1, nc + 1):
        if nc % g:
            continue
        j = nc // g
        lanes = j * wp
        L = _round_up(lanes, 128)
        step_bytes = 2 * (hin + hout) * L * 4          # double-buffered in/out blocks
        if k > 3:
            step_bytes += k * k * SR * L * 4           # tap staging scratch
        pen = 0
        if lanes < 128:
            pen += 1                                   # lane-sparse packing (waste)
        if L > 768:
            pen += 1                                   # selection network spills vregs
        if L > 2048:
            pen += 1
        if step_bytes < 512 * 1024:
            pen += 1                                   # per-step DMA too small
        if step_bytes > 12 * 2**20:
            pen += 2                                   # keep footprint well under VMEM
        if g < 2:
            pen += 1                                   # v7x: 2 TCs want >= 2 parallel steps
        key = (pen, g % 2, abs(step_bytes - target), -g)
        if best_key is None or key < best_key:
            best_key, best = key, (g, j)
    return best


@functools.partial(jax.jit, static_argnums=1)
def median_blur_pallas(image: jax.Array, kernel: int) -> jax.Array:
    """image: (N, C, H, W) -> (N, C, H, W) median-filtered (float32)."""
    if kernel % 2 != 1:
        raise ValueError("MF/MedianBlur Pallas kernel supports odd kernel sizes only")
    N, C, H, W = image.shape
    x = image.astype(jnp.float32)
    if kernel == 1:                                   # 1x1 median == identity
        return x

    p = (kernel - 1) // 2
    Wp = W + 2 * p                                    # per-channel padded width
    NC = N * C
    Hout = _round_up(H, SR)                           # aligned output rows
    Hin = Hout + 2 * p                                # rows incl. vertical zero pad
    G, J = _choose_groups(NC, Wp, Hin, Hout, kernel)
    lanes = J * Wp
    L = _round_up(lanes, 128)                         # lane-dense block width

    # Pack channels along the lane axis with ALL zero padding baked into one copy:
    # per channel [p zeros | W data | p zeros], p zero rows top, zero rows bottom.
    xp = jnp.pad(x, ((0, 0), (0, 0), (p, Hout - H + p), (p, p)))
    xp = xp.reshape(G, J, Hin, Wp).transpose(0, 2, 1, 3).reshape(G, Hin, lanes)
    if L != lanes:
        xp = jnp.pad(xp, ((0, 0), (0, 0), (0, L - lanes)))

    in_bytes = Hin * L * 4
    out_bytes = Hout * L * 4

    if kernel == 3:
        kern = _median3_kernel
        scratch_shapes = []
        stage_bytes = 0
    else:
        ch = 256 if L % 256 == 0 else 128
        kern = functools.partial(_median_generic_kernel, k=kernel, ch=ch)
        scratch_shapes = [pltpu.VMEM((kernel * kernel, SR, L), jnp.float32)]
        stage_bytes = kernel * kernel * SR * L * 4

    needed = 2 * (in_bytes + out_bytes) + stage_bytes + (4 << 20)
    vmem_limit = int(min(max(needed, 32 << 20), 48 << 20))

    out = pl.pallas_call(
        kern,
        out_shape=jax.ShapeDtypeStruct((G, Hout, L), jnp.float32),
        grid_spec=pltpu.PrefetchScalarGridSpec(
            num_scalar_prefetch=0,
            grid=(G,),
            in_specs=[pl.BlockSpec((1, Hin, L), lambda i: (i, 0, 0))],
            out_specs=pl.BlockSpec((1, Hout, L), lambda i: (i, 0, 0)),
            scratch_shapes=scratch_shapes,
        ),
        compiler_params=pltpu.CompilerParams(
            dimension_semantics=("parallel",),
            vmem_limit_bytes=vmem_limit,
        ),
    )(xp)

    out = out[:, :H, :lanes].reshape(G, H, J, Wp).transpose(0, 2, 1, 3)
    out = out.reshape(N, C, H, Wp)[:, :, :, p:p + W]
    return out


class MF:
    """JAX/Pallas port of the PyTorch MF module (median blur; cover ignored)."""

    def __init__(self, kernel: int):
        self.kernel = kernel  # MedianBlur((kernel, kernel)); no trainable params

    def __call__(self, image_and_cover):
        image, cover_image = image_and_cover  # cover_image unused (as in PyTorch)
        return median_blur_pallas(image, self.kernel)


# ---------------------------------------------------------------------------
# pure-JAX reference (kornia median_blur + torch.median lower-median)
# ---------------------------------------------------------------------------

def _median_blur_ref(image: jax.Array, kernel: int) -> jax.Array:
    N, C, H, W = image.shape
    p = (kernel - 1) // 2
    xp = jnp.pad(image.astype(jnp.float32), ((0, 0), (0, 0), (p, p), (p, p)))
    wins = []
    for dy in range(kernel):
        for dx in range(kernel):
            wins.append(xp[:, :, dy:dy + H, dx:dx + W])
    stacked = jnp.stack(wins, axis=2)             # (N, C, k*k, H, W)
    srt = jnp.sort(stacked, axis=2)
    return srt[:, :, (kernel * kernel - 1) // 2]  # lower median


if __name__ == "__main__":
    key = jax.random.PRNGKey(0)
    k_img, k_cov = jax.random.split(key)

    N, C, H, W = 2, 4, 16, 16
    image = jax.random.uniform(k_img, (N, C, H, W), dtype=jnp.float32)
    cover = jax.random.uniform(k_cov, (N, C, H, W), dtype=jnp.float32)

    # 3x3 (column-sort median-of-9 path)
    mf3 = MF(3)
    out3 = jax.block_until_ready(mf3((image, cover)))
    ref3 = jax.block_until_ready(_median_blur_ref(image, 3))
    assert out3.shape == (N, C, H, W)
    np.testing.assert_allclose(np.asarray(out3), np.asarray(ref3), rtol=1e-6, atol=1e-6)

    # 5x5 (generic forgetful-selection path with tap staging + lane chunks)
    mf5 = MF(5)
    out5 = jax.block_until_ready(mf5((image, cover)))
    ref5 = jax.block_until_ready(_median_blur_ref(image, 5))
    np.testing.assert_allclose(np.asarray(out5), np.asarray(ref5), rtol=1e-6, atol=1e-6)

    print("KERNEL_OK")
</pallas_src>

<mosaic_0001>
module attributes {stable_mosaic.version = 11 : i64} {
  func.func @_median3_kernel(%arg0: i32, %arg1: memref<1x18x128xf32, #tpu.memory_space<vmem>>, %arg2: memref<1x16x128xf32, #tpu.memory_space<vmem>>) attributes {dimension_semantics = [#tpu.dimension_semantics<parallel>], iteration_bounds = array<i64: 8>, scalar_prefetch = 0 : i64, scratch_operands = 0 : i64, tpu.core_type = #tpu.core_type<tc>, window_params = [{transform_indices = @transform_0, window_bounds = array<i64: 1, 18, 128>}, {transform_indices = @transform_1, window_bounds = array<i64: 1, 16, 128>}]} {
    %c0_i32 = arith.constant 0 : i32
    %c2_i32 = arith.constant 2 : i32
    %0 = arith.addi %c0_i32, %c2_i32 : i32
    %c1_i32 = arith.constant 1 : i32
    scf.for %arg3 = %c0_i32 to %0 step %c1_i32  : i32 {
      %c1_i32_1 = arith.constant 1 : i32
      %1 = arith.muli %arg3, %c1_i32_1 : i32
      %c0_i32_2 = arith.constant 0 : i32
      %2 = arith.addi %c0_i32_2, %1 : i32
      %c8_i32 = arith.constant 8 : i32
      %3 = arith.muli %2, %c8_i32 : i32
      %4 = tpu.assume_multiple %3, 8 : i32
      %c0 = arith.constant 0 : index
      %5 = arith.index_cast %4 : i32 to index
      %c0_3 = arith.constant 0 : index
      %6 = vector.load %arg1[%c0, %5, %c0_3] : memref<1x18x128xf32, #tpu.memory_space<vmem>>, vector<1x8x128xf32>
      %7 = vector.shape_cast %6 : vector<1x8x128xf32> to vector<8x128xf32>
      %c1_i32_4 = arith.constant 1 : i32
      %8 = arith.addi %4, %c1_i32_4 : i32
      %c0_5 = arith.constant 0 : index
      %9 = arith.index_cast %8 : i32 to index
      %c0_6 = arith.constant 0 : index
      %10 = vector.load %arg1[%c0_5, %9, %c0_6] : memref<1x18x128xf32, #tpu.memory_space<vmem>>, vector<1x8x128xf32>
      %11 = vector.shape_cast %10 : vector<1x8x128xf32> to vector<8x128xf32>
      %c2_i32_7 = arith.constant 2 : i32
      %12 = arith.addi %4, %c2_i32_7 : i32
      %c0_8 = arith.constant 0 : index
      %13 = arith.index_cast %12 : i32 to index
      %c0_9 = arith.constant 0 : index
      %14 = vector.load %arg1[%c0_8, %13, %c0_9] : memref<1x18x128xf32, #tpu.memory_space<vmem>>, vector<1x8x128xf32>
      %15 = vector.shape_cast %14 : vector<1x8x128xf32> to vector<8x128xf32>
      %16 = arith.minimumf %7, %11 : vector<8x128xf32>
      %17 = arith.maximumf %7, %11 : vector<8x128xf32>
      %18 = arith.minimumf %17, %15 : vector<8x128xf32>
      %19 = arith.maximumf %17, %15 : vector<8x128xf32>
      %20 = arith.minimumf %16, %18 : vector<8x128xf32>
      %21 = arith.maximumf %16, %18 : vector<8x128xf32>
      %c1_i32_10 = arith.constant 1 : i32
      %22 = tpu.dynamic_rotate %20 by %c1_i32_10 dim 1 : vector<8x128xf32>, i32 -> vector<8x128xf32>
      %c127_i32 = arith.constant 127 : i32
      %23 = tpu.dynamic_rotate %20 by %c127_i32 dim 1 : vector<8x128xf32>, i32 -> vector<8x128xf32>
      %24 = arith.maximumf %22, %20 : vector<8x128xf32>
      %25 = arith.maximumf %24, %23 : vector<8x128xf32>
      %c1_i32_11 = arith.constant 1 : i32
      %26 = tpu.dynamic_rotate %21 by %c1_i32_11 dim 1 : vector<8x128xf32>, i32 -> vector<8x128xf32>
      %c127_i32_12 = arith.constant 127 : i32
      %27 = tpu.dynamic_rotate %21 by %c127_i32_12 dim 1 : vector<8x128xf32>, i32 -> vector<8x128xf32>
      %28 = arith.minimumf %26, %21 : vector<8x128xf32>
      %29 = arith.maximumf %26, %21 : vector<8x128xf32>
      %30 = arith.minimumf %29, %27 : vector<8x128xf32>
      %31 = arith.maximumf %28, %30 : vector<8x128xf32>
      %c1_i32_13 = arith.constant 1 : i32
      %32 = tpu.dynamic_rotate %19 by %c1_i32_13 dim 1 : vector<8x128xf32>, i32 -> vector<8x128xf32>
      %c127_i32_14 = arith.constant 127 : i32
      %33 = tpu.dynamic_rotate %19 by %c127_i32_14 dim 1 : vector<8x128xf32>, i32 -> vector<8x128xf32>
      %34 = arith.minimumf %32, %19 : vector<8x128xf32>
      %35 = arith.minimumf %34, %33 : vector<8x128xf32>
      %36 = arith.minimumf %25, %31 : vector<8x128xf32>
      %37 = arith.maximumf %25, %31 : vector<8x128xf32>
      %38 = arith.minimumf %37, %35 : vector<8x128xf32>
      %39 = arith.maximumf %36, %38 : vector<8x128xf32>
      %c0_15 = arith.constant 0 : index
      %40 = arith.index_cast %4 : i32 to index
      %c0_16 = arith.constant 0 : index
      %41 = vector.load %arg2[%c0_15, %40, %c0_16] : memref<1x16x128xf32, #tpu.memory_space<vmem>>, vector<1x8x128xf32>
      %42 = vector.shape_cast %41 : vector<1x8x128xf32> to vector<8x128xf32>
      %43 = vector.shape_cast %39 : vector<8x128xf32> to vector<1x8x128xf32>
      tpu.vector_store %arg2[%c0_15, %40, %c0_16], %43 {strides = array<i32>} : memref<1x16x128xf32, #tpu.memory_space<vmem>>, vector<1x8x128xf32>,
    }
    %c2_i32_0 = arith.constant 2 : i32
    return
  }
  func.func @transform_0(%arg0: i32) -> (i32, i32, i32) {
    %c0_i32 = arith.constant 0 : i32
    %c0_i32_0 = arith.constant 0 : i32
    %c0_i32_1 = arith.constant 0 : i32
    return %arg0, %c0_i32, %c0_i32_0 : i32, i32, i32
  }
  func.func @transform_1(%arg0: i32) -> (i32, i32, i32) {
    %c0_i32 = arith.constant 0 : i32
    %c0_i32_0 = arith.constant 0 : i32
    %c0_i32_1 = arith.constant 0 : i32
    return %arg0, %c0_i32, %c0_i32_0 : i32, i32, i32
  }
}

</mosaic_0001>

<llo_original>
// kernel: median_blur_pallas.1
$region0: #{median_blur_pallas.1}
  #allocation0 [shape = 'u32[]', space=smem, size = 0x4, offset = 0x4, fixed_abs, tag = 'smem constant byte address 0x4 - core index']
  #allocation1 [shape = 'u32[144,128]{1,0:T(1,128)}', space=vmem, size = 0x12000, scoped, tag = 'internal scratch']
  %s0 = inlined_call_operand.vmem [shape: f32[8,18,128], index: 0, kind: input, shape index: {}]
  %s1 = inlined_call_operand.vmem [shape: f32[8,16,128], index: 1, kind: output, shape index: {}]
  %s2 = sld [smem:[#allocation0]]
  $region44: #{median_blur_pallas.1} parent=0
    _
  %s4 = ssub.s32 1, %s2
  %s5 = scalar_select 0, %s4, %s2
  loop: start=0, step=1, limit=10
  $region2: #{median_blur_pallas.1} parent=0 // loop_pre_header
    _
  $region3: #{median_blur_pallas.1} parent=0 // loop_header
    %s7 = sphi 0, %s11
    %p8 = scmp.ge.s32.totalorder %s7, 10
    %s17 = sphi 0, %s19
    %s20 = sphi 0, %s17
    %s21 = sphi 0, %s20
    %s37 = sphi 0, %s21
    %s43 = sphi 0, %s45
    %s46 = sphi 0, %s43
    %s47 = sphi 0, %s46
    %s63 = sphi 0, %s47
  $region4: #{median_blur_pallas.1} parent=0 // loop_header_branch
    %10 = sbr.rel (%p8) target = $region8
  $region5: #{median_blur_pallas.1} parent=0 // loop_body
    %s12 = ssub.s32 %s7, 1
    %s13 = ssub.s32 %s7, 2
    %s14 = sadd.s32 %s7, 1
    %s15 = ssub.s32 %s7, %s14
    %p16 = scmp.eq.s32.totalorder %s15, 0
    %s18 = sadd.s32 %s17, 1
    %s19 = scalar_select %p16, %s17, %s18
    %p22 = pneg %p16
    %p23 = scmp.eq.s32.totalorder %s7, 7
    %p24 = por %p22, %p23
    %p25 = scmp.ne.s32.totalorder %s17, %s20
    %p26 = scmp.eq.s32.totalorder %s7, 0
    %p27 = por %p25, %p26
    %p28 = scmp.ne.s32.totalorder %s17, %s20
    %p29 = scmp.eq.s32.totalorder %s12, 7
    %p30 = por %p28, %p29
    %p31 = scmp.ne.s32.totalorder %s20, %s21
    %p32 = scmp.eq.s32.totalorder %s12, 0
    %p33 = por %p31, %p32
    %p34 = scmp.ne.s32.totalorder %s20, %s21
    %p35 = scmp.eq.s32.totalorder %s13, 7
    %p36 = por %p34, %p35
    %p38 = scmp.ne.s32.totalorder %s21, %s37
    %p39 = scmp.eq.s32.totalorder %s13, 0
    %p40 = por %p38, %p39
    %s41 = ssub.s32 %s7, %s14
    %p42 = scmp.eq.s32.totalorder %s41, 0
    %s44 = sadd.s32 %s43, 1
    %s45 = scalar_select %p42, %s43, %s44
    %p48 = pneg %p42
    %p49 = scmp.eq.s32.totalorder %s7, 7
    %p50 = por %p48, %p49
    %p51 = scmp.ne.s32.totalorder %s43, %s46
    %p52 = scmp.eq.s32.totalorder %s7, 0
    %p53 = por %p51, %p52
    %p54 = scmp.ne.s32.totalorder %s43, %s46
    %p55 = scmp.eq.s32.totalorder %s12, 7
    %p56 = por %p54, %p55
    %p57 = scmp.ne.s32.totalorder %s46, %s47
    %p58 = scmp.eq.s32.totalorder %s12, 0
    %p59 = por %p57, %p58
    %p60 = scmp.ne.s32.totalorder %s46, %s47
    %p61 = scmp.eq.s32.totalorder %s13, 7
    %p62 = por %p60, %p61
    %p64 = scmp.ne.s32.totalorder %s47, %s63
    %p65 = scmp.eq.s32.totalorder %s13, 0
    %p66 = por %p64, %p65
    %p67 = scmp.le.s32.totalorder 1, %s7
    %p68 = scmp.lt.s32.totalorder %s7, 9
    %p69 = pnand %p67, %p68
    %p70 = pneg %p69
    // Predicated region
    $region9: #{median_blur_pallas.1} parent=5 // pred_check
      _
    $region10: #{median_blur_pallas.1} parent=5 // pred_check_branch
      %72 = sbr.rel (%p69) target = $region12
    $region11: #{median_blur_pallas.1} parent=5 // pred_region
      %s73 = ssub.s32 %s7, 1
    $region12: #{median_blur_pallas.1} parent=5 // pred_fallthru
      _
    %p74 = scmp.lt.s32.totalorder %s7, 8
    // Predicated region
    $region13: #{median_blur_pallas.1} parent=5 // pred_check
      %p75 = pneg %p74
    $region14: #{median_blur_pallas.1} parent=5 // pred_check_branch
      %77 = sbr.rel (%p75) target = $region16
    $region15: #{median_blur_pallas.1} parent=5 // pred_region
      // Predicated region
      $region17: #{median_blur_pallas.1} parent=15 // pred_check
        %p78 = pneg %p27
      $region18: #{median_blur_pallas.1} parent=15 // pred_check_branch
        %80 = sbr.rel (%p78) target = $region20
      $region19: #{median_blur_pallas.1} parent=15 // pred_region
        %p81 = scmp.lt.s32.totalorder %s7, 7
        %s82 = scalar_select %p81, %s7, 7
        %s83 = smul.addr %s82, 3
        %s84 = smul.addr %s83, 8
        %s85 = scalar_lea.vmem %s0, %s84
      $region20: #{median_blur_pallas.1} parent=15 // pred_fallthru
        _
    $region16: #{median_blur_pallas.1} parent=5 // pred_fallthru
      _
    %p86 = scmp.le.s32.totalorder 1, %s7
    %p87 = scmp.lt.s32.totalorder %s7, 9
    %p88 = pnand %p86, %p87
    %p89 = pneg %p88
    // Predicated region
    $region21: #{median_blur_pallas.1} parent=5 // pred_check
      _
    $region22: #{median_blur_pallas.1} parent=5 // pred_check_branch
      %91 = sbr.rel (%p88) target = $region24
    $region23: #{median_blur_pallas.1} parent=5 // pred_region
      %s92 = ssub.s32 %s7, 1
      %p93 = scmp.lt.s32.totalorder %s12, 7
      %s94 = scalar_select %p93, %s12, 7
      %s95 = smul.addr %s94, 3
      %s96 = smul.addr %s95, 8
      %s97 = scalar_lea.vmem %s0, %s96
      %p98 = pneg %p33
      %p99 = pneg %p30
      %p100 = pneg %p59
      %p101 = pneg %p56
      %p102 = scmp.lt.s32.totalorder %s12, 7
      %s103 = scalar_select %p102, %s12, 7
      %s104 = smul.addr %s103, 2
      %s105 = smul.addr %s104, 8
      %s106 = scalar_lea.vmem %s1, %s105
      %p107 = scmp.lt.s32.totalorder %s12, 7
      %s108 = scalar_select %p107, %s12, 7
      %s109 = smul.addr %s108, 3
      %s110 = smul.addr %s109, 8
      %s111 = scalar_lea.vmem %s0, %s110
      %p112 = scmp.lt.s32.totalorder %s12, 7
      %s113 = scalar_select %p112, %s12, 7
      %s114 = smul.addr %s113, 2
      %s115 = smul.addr %s114, 8
      %s116 = scalar_lea.vmem %s1, %s115
      loop: start=0, step=1, limit=2
      $region25: #{median_blur_pallas.1} parent=23 // loop_pre_header
        _
      $region26: #{median_blur_pallas.1} parent=23 // loop_header
        %s118 = sphi 0, %s122
        %p119 = scmp.ge.s32.totalorder %s118, 2
      $region27: #{median_blur_pallas.1} parent=23 // loop_header_branch
        %121 = sbr.rel (%p119) target = $region31
      $region28: #{median_blur_pallas.1} parent=23 // loop_body
        %s123 = smul.u32 %s118, 8
        %s124 = scalar_lea.vmem %s111, %s123
        %v125 = vld [vmem:[%s124] sm:$0xff]
        %s126 = sadd.s32 %s123, 1
        %s127 = scalar_lea.vmem %s111, %s126
        %v128 = vld [vmem:[%s127] sm:$0xff]
        %s129 = sadd.s32 %s123, 2
        %s130 = scalar_lea.vmem %s111, %s129
        %v131 = vld [vmem:[%s130] sm:$0xff]
        %v132 = vmin.f32 %v125, %v128
        %v133 = vmax.f32 %v125, %v128
        %v134 = vmin.f32 %v133, %v131
        %v135 = vmax.f32 %v133, %v131
        %v136 = vmin.f32 %v132, %v134
        %v137 = vmax.f32 %v132, %v134
        %138 = vrot.lane.b32.xlu0 %v136, 1
        %v139 = vpop.permute.xlu0 %138
        %140 = vrot.lane.b32.xlu0 %v136, 127
        %v141 = vpop.permute.xlu0 %140
        %v142 = vmax.f32 %v139, %v136
        %v143 = vmax.f32 %v142, %v141
        %144 = vrot.lane.b32.xlu0 %v137, 1
        %v145 = vpop.permute.xlu0 %144
        %146 = vrot.lane.b32.xlu0 %v137, 127
        %v147 = vpop.permute.xlu0 %146
        %v148 = vmin.f32 %v145, %v137
        %v149 = vmax.f32 %v145, %v137
        %v150 = vmin.f32 %v149, %v147
        %v151 = vmax.f32 %v148, %v150
        %152 = vrot.lane.b32.xlu0 %v135, 1
        %v153 = vpop.permute.xlu0 %152
        %154 = vrot.lane.b32.xlu0 %v135, 127
        %v155 = vpop.permute.xlu0 %154
        %v156 = vmin.f32 %v153, %v135
        %v157 = vmin.f32 %v156, %v155
        %v158 = vmin.f32 %v143, %v151
        %v159 = vmax.f32 %v143, %v151
        %v160 = vmin.f32 %v159, %v157
        %v161 = vmax.f32 %v158, %v160
        %s162 = scalar_lea.vmem %s116, %s123
        %163 = vst [vmem:[%s162] sm:$0xff] %v161
      $region29: #{median_blur_pallas.1} parent=23 // loop_footer
        %s122 = sadd.s32 1, %s118
      $region30: #{median_blur_pallas.1} parent=23 // loop_footer_branch
        %117 = sbr.rel target = $region26
      $region31: #{median_blur_pallas.1} parent=23 // loop_exit
        _
      %p164 = scmp.lt.s32.totalorder %s12, 7
      %s165 = scalar_select %p164, %s12, 7
      %s166 = smul.addr %s165, 2
      %s167 = smul.addr %s166, 8
      %s168 = scalar_lea.vmem %s1, %s167
      // Predicated region
      $region32: #{median_blur_pallas.1} parent=23 // pred_check
        %p169 = pneg %p56
      $region33: #{median_blur_pallas.1} parent=23 // pred_check_branch
        %171 = sbr.rel (%p169) target = $region35
      $region34: #{median_blur_pallas.1} parent=23 // pred_region
        _
      $region35: #{median_blur_pallas.1} parent=23 // pred_fallthru
        _
    $region24: #{median_blur_pallas.1} parent=5 // pred_fallthru
      _
    %p172 = scmp.le.s32.totalorder 2, %s7
    // Predicated region
    $region36: #{median_blur_pallas.1} parent=5 // pred_check
      %p173 = pneg %p172
    $region37: #{median_blur_pallas.1} parent=5 // pred_check_branch
      %175 = sbr.rel (%p173) target = $region39
    $region38: #{median_blur_pallas.1} parent=5 // pred_region
      %s176 = ssub.s32 %s7, 2
      // Predicated region
      $region40: #{median_blur_pallas.1} parent=38 // pred_check
        %p177 = pneg %p62
      $region41: #{median_blur_pallas.1} parent=38 // pred_check_branch
        %179 = sbr.rel (%p177) target = $region43
      $region42: #{median_blur_pallas.1} parent=38 // pred_region
        %p180 = scmp.lt.s32.totalorder %s13, 7
        %s181 = scalar_select %p180, %s13, 7
        %s182 = smul.addr %s181, 2
        %s183 = smul.addr %s182, 8
        %s184 = scalar_lea.vmem %s1, %s183
      $region43: #{median_blur_pallas.1} parent=38 // pred_fallthru
        _
    $region39: #{median_blur_pallas.1} parent=5 // pred_fallthru
      _
  $region6: #{median_blur_pallas.1} parent=0 // loop_footer
    %s11 = sadd.s32 1, %s7
  $region7: #{median_blur_pallas.1} parent=0 // loop_footer_branch
    %6 = sbr.rel target = $region3
  $region8: #{median_blur_pallas.1} parent=0 // loop_exit
    _

</llo_original>
